<compile_context>
chip_gen: v5e
topology: v5e:2x2
jax: 0.10.0
libtpu: 0.0.40
codegen_flags: <defaults>
</compile_context>

<pallas_src>
import functools
import math

import jax
import jax.numpy as jnp
from jax.experimental import pallas as pl
from jax.experimental.pallas import tpu as pltpu


# --------------------------------------------------------------------------------------
# Generation-aware budgets
# --------------------------------------------------------------------------------------
def _tpu_budget():
    """Pick the VMEM limit and row-tile default from the chip's VMEM capacity."""
    try:
        cap = pltpu.get_tpu_info().vmem_capacity_bytes
    except Exception:
        cap = 64 * 1024 * 1024  # conservative (v7x-sized) fallback
    vmem_limit = min(int(cap * 3 // 4), 100 * 1024 * 1024)  # ~96MiB v5e/v6e, 48MiB v7x
    tm_default = 512 if cap >= 96 * 1024 * 1024 else 256
    return vmem_limit, tm_default


_VMEM_LIMIT, _TM_DEFAULT = _tpu_budget()


def _round_up(x, m):
    return (x + m - 1) // m * m


def _pad2d(a, rows, cols):
    pr, pc = rows - a.shape[0], cols - a.shape[1]
    if pr == 0 and pc == 0:
        return a
    return jnp.pad(a, ((0, pr), (0, pc)))


def _pick_tile(total, max_tile):
    """Largest multiple-of-128 tile <= max_tile dividing `total` (total % 128 == 0)."""
    if total <= max_tile:
        return total
    for cand in range(max_tile, 127, -128):
        if total % cand == 0:
            return cand
    return 128


# --------------------------------------------------------------------------------------
# Fused LayerNorm + Linear:  y = LN(x) @ W + b     (used for LN1 -> QKV projection)
# --------------------------------------------------------------------------------------
def _ln_linear_kernel(x_ref, g_ref, b_ref, w_ref, bias_ref, o_ref, *, eps):
    x = x_ref[...]                                          # (tm, C) f32, full feature row
    mu = jnp.mean(x, axis=-1, keepdims=True)
    xc = x - mu
    var = jnp.mean(xc * xc, axis=-1, keepdims=True)
    xn = xc * jax.lax.rsqrt(var + eps) * g_ref[...] + b_ref[...]
    y = jnp.dot(xn.astype(jnp.bfloat16), w_ref[...],
                preferred_element_type=jnp.float32) + bias_ref[...]
    o_ref[...] = y.astype(o_ref.dtype)


def ln_linear_pallas(x2d, gamma, beta, w, b, *, eps=1e-6, out_dtype=jnp.bfloat16,
                     tm=None, max_tn=2048):
    """x2d: (M, C) f32; w: (C, Np) bf16 (Np % 128 == 0); b: (Np,) f32 -> (M, Np)."""
    M, C = x2d.shape
    Cw, Np = w.shape
    assert Cw == C and Np % 128 == 0
    tm = tm or _TM_DEFAULT
    tm_eff = min(tm, _round_up(M, 8))
    Mp = _round_up(M, tm_eff)
    tn = _pick_tile(Np, max_tn)                 # tile output width for v7x VMEM safety
    xp = _pad2d(x2d, Mp, C)
    g2 = gamma.reshape(1, C).astype(jnp.float32)
    b2 = beta.reshape(1, C).astype(jnp.float32)
    bias2 = b.reshape(1, Np).astype(jnp.float32)
    out = pl.pallas_call(
        functools.partial(_ln_linear_kernel, eps=eps),
        out_shape=jax.ShapeDtypeStruct((Mp, Np), out_dtype),
        grid_spec=pltpu.PrefetchScalarGridSpec(
            num_scalar_prefetch=0,
            grid=(Mp // tm_eff, Np // tn),
            in_specs=[
                pl.BlockSpec((tm_eff, C), lambda i, n: (i, 0)),
                pl.BlockSpec((1, C), lambda i, n: (0, 0)),
                pl.BlockSpec((1, C), lambda i, n: (0, 0)),
                pl.BlockSpec((C, tn), lambda i, n: (0, n)),
                pl.BlockSpec((1, tn), lambda i, n: (0, n)),
            ],
            out_specs=pl.BlockSpec((tm_eff, tn), lambda i, n: (i, n)),
        ),
        compiler_params=pltpu.CompilerParams(
            dimension_semantics=("parallel", "parallel"),
            vmem_limit_bytes=_VMEM_LIMIT),
    )(xp, g2, b2, w, bias2)
    return out[:M] if Mp != M else out


# --------------------------------------------------------------------------------------
# Attention core: all heads of one batch element per grid step, operating directly on
# (B, N, 3*Cp) q/k/v column slabs (no HBM transposes). Scale is pre-folded into Wq.
# --------------------------------------------------------------------------------------
def _attn_kernel(q_ref, k_ref, v_ref, o_ref, *, num_heads, head_dim):
    q = q_ref[0]                                            # (N, Cp) bf16
    k = k_ref[0]
    v = v_ref[0]
    outs = []
    # TODO(synk): for very long N (>~1K), tile the KV axis with an online-softmax
    # (flash) accumulator instead of materializing the full (N, N) score matrix.
    for h in range(num_heads):
        lo = h * head_dim
        qh = q[:, lo:lo + head_dim]
        kh = k[:, lo:lo + head_dim]
        vh = v[:, lo:lo + head_dim]
        s = jax.lax.dot_general(qh, kh, (((1,), (1,)), ((), ())),
                                preferred_element_type=jnp.float32)     # (N, N)
        s = s - jnp.max(s, axis=-1, keepdims=True)
        p = jnp.exp(s)
        p = p * pl.reciprocal(jnp.sum(p, axis=-1, keepdims=True), approx=True)
        outs.append(jnp.dot(p.astype(jnp.bfloat16), vh,
                            preferred_element_type=jnp.float32))        # (N, hd)
    o = jnp.concatenate(outs, axis=-1)                       # (N, num_heads*head_dim)
    c_real = num_heads * head_dim
    cp = o_ref.shape[-1]
    if cp > c_real:                                          # zero the padded columns
        o = jnp.concatenate([o, jnp.zeros((o.shape[0], cp - c_real), o.dtype)], axis=-1)
    o_ref[0] = o.astype(o_ref.dtype)


def attention_pallas(qkv3, *, num_heads, head_dim, c_pad):
    """qkv3: (B, N, 3*c_pad) bf16 with [q|k|v] column slabs -> (B, N, c_pad) bf16."""
    B, N, threeC = qkv3.shape
    assert threeC == 3 * c_pad and c_pad % 128 == 0
    return pl.pallas_call(
        functools.partial(_attn_kernel, num_heads=num_heads, head_dim=head_dim),
        out_shape=jax.ShapeDtypeStruct((B, N, c_pad), jnp.bfloat16),
        grid_spec=pltpu.PrefetchScalarGridSpec(
            num_scalar_prefetch=0,
            grid=(B,),
            in_specs=[
                pl.BlockSpec((1, N, c_pad), lambda b: (b, 0, 0)),   # q slab
                pl.BlockSpec((1, N, c_pad), lambda b: (b, 0, 1)),   # k slab
                pl.BlockSpec((1, N, c_pad), lambda b: (b, 0, 2)),   # v slab
            ],
            out_specs=pl.BlockSpec((1, N, c_pad), lambda b: (b, 0, 0)),
        ),
        compiler_params=pltpu.CompilerParams(
            dimension_semantics=("parallel",),
            vmem_limit_bytes=_VMEM_LIMIT),
    )(qkv3, qkv3, qkv3)


# --------------------------------------------------------------------------------------
# Linear with fused residual add:  out = res + a @ W + b    (attention output projection)
# --------------------------------------------------------------------------------------
def _linear_residual_kernel(a_ref, w_ref, bias_ref, res_ref, o_ref):
    y = jnp.dot(a_ref[...], w_ref[...], preferred_element_type=jnp.float32)
    o_ref[...] = (y + bias_ref[...] + res_ref[...]).astype(o_ref.dtype)


def linear_residual_pallas(a2d, w, b, res2d, *, tm=None):
    """a2d: (M, K) bf16; w: (K, N) bf16; b: (N,) f32; res2d: (M, N) f32 -> (M, N) f32."""
    M, K = a2d.shape
    Kw, N = w.shape
    assert Kw == K and res2d.shape == (M, N)
    tm = tm or _TM_DEFAULT
    tm_eff = min(tm, _round_up(M, 8))
    Mp = _round_up(M, tm_eff)
    ap = _pad2d(a2d, Mp, K)
    rp = _pad2d(res2d, Mp, N)
    b2 = b.reshape(1, N).astype(jnp.float32)
    out = pl.pallas_call(
        _linear_residual_kernel,
        out_shape=jax.ShapeDtypeStruct((Mp, N), jnp.float32),
        grid_spec=pltpu.PrefetchScalarGridSpec(
            num_scalar_prefetch=0,
            grid=(Mp // tm_eff,),
            in_specs=[
                pl.BlockSpec((tm_eff, K), lambda i: (i, 0)),
                pl.BlockSpec((K, N), lambda i: (0, 0)),
                pl.BlockSpec((1, N), lambda i: (0, 0)),
                pl.BlockSpec((tm_eff, N), lambda i: (i, 0)),
            ],
            out_specs=pl.BlockSpec((tm_eff, N), lambda i: (i, 0)),
        ),
        compiler_params=pltpu.CompilerParams(
            dimension_semantics=("parallel",),
            vmem_limit_bytes=_VMEM_LIMIT),
    )(ap, w, b2, rp)
    return out[:M] if Mp != M else out


# --------------------------------------------------------------------------------------
# Fused LN2 + Mlp(swish) + residual. Hidden dim tiled on a reduction grid axis; the
# f32 output block is resident across it and used directly as the accumulator (P3).
# --------------------------------------------------------------------------------------
def _ln_mlp_residual_kernel(x_ref, g_ref, b_ref, w1_ref, b1_ref, w2_ref, b2_ref,
                            o_ref, *, eps):
    j = pl.program_id(1)

    @pl.when(j == 0)
    def _():
        o_ref[...] = jnp.zeros_like(o_ref)

    x = x_ref[...]                                          # (tm, C) f32 (same block ∀ j)
    mu = jnp.mean(x, axis=-1, keepdims=True)
    xc = x - mu
    var = jnp.mean(xc * xc, axis=-1, keepdims=True)
    xn = xc * jax.lax.rsqrt(var + eps) * g_ref[...] + b_ref[...]
    h = jnp.dot(xn.astype(jnp.bfloat16), w1_ref[...],
                preferred_element_type=jnp.float32) + b1_ref[...]   # (tm, th)
    h = h * jax.nn.sigmoid(h)                                        # swish / SiLU
    o_ref[...] += jnp.dot(h.astype(jnp.bfloat16), w2_ref[...],
                          preferred_element_type=jnp.float32)

    @pl.when(j == pl.num_programs(1) - 1)
    def _():
        o_ref[...] += b2_ref[...] + x                        # fc2 bias + residual (pre-LN x)


def ln_mlp_residual_pallas(x2d, gamma, beta, w1, b1, w2, b2, *, eps=1e-6,
                           tm=None, max_th=1024):
    """x2d: (M, C) f32; w1: (C, H) bf16; w2: (H, C) bf16 -> x2d + Mlp(LN(x2d))."""
    M, C = x2d.shape
    Cw, H = w1.shape
    Hw, Cout = w2.shape
    assert Cw == C and Cout == C and Hw == H
    tm = tm or _TM_DEFAULT
    tm_eff = min(tm, _round_up(M, 8))
    Mp = _round_up(M, tm_eff)
    th = min(max_th, _round_up(H, 128))
    Hp = _round_up(H, th)
    xp = _pad2d(x2d, Mp, C)
    g2 = gamma.reshape(1, C).astype(jnp.float32)
    be2 = beta.reshape(1, C).astype(jnp.float32)
    w1p = _pad2d(w1, C, Hp)
    b1p = _pad2d(b1.reshape(1, H).astype(jnp.float32), 1, Hp)   # padded SiLU(0)=0 -> no-op
    w2p = _pad2d(w2, Hp, C)
    b2p = b2.reshape(1, C).astype(jnp.float32)
    out = pl.pallas_call(
        functools.partial(_ln_mlp_residual_kernel, eps=eps),
        out_shape=jax.ShapeDtypeStruct((Mp, C), jnp.float32),
        grid_spec=pltpu.PrefetchScalarGridSpec(
            num_scalar_prefetch=0,
            grid=(Mp // tm_eff, Hp // th),
            in_specs=[
                pl.BlockSpec((tm_eff, C), lambda i, j: (i, 0)),
                pl.BlockSpec((1, C), lambda i, j: (0, 0)),
                pl.BlockSpec((1, C), lambda i, j: (0, 0)),
                pl.BlockSpec((C, th), lambda i, j: (0, j)),
                pl.BlockSpec((1, th), lambda i, j: (0, j)),
                pl.BlockSpec((th, C), lambda i, j: (j, 0)),
                pl.BlockSpec((1, C), lambda i, j: (0, 0)),
            ],
            out_specs=pl.BlockSpec((tm_eff, C), lambda i, j: (i, 0)),
        ),
        compiler_params=pltpu.CompilerParams(
            dimension_semantics=("parallel", "arbitrary"),
            vmem_limit_bytes=_VMEM_LIMIT),
    )(xp, g2, be2, w1p, b1p, w2p, b2p)
    return out[:M] if Mp != M else out


# --------------------------------------------------------------------------------------
# Block forward (matches PyTorch Block.forward)
# --------------------------------------------------------------------------------------
def block_forward(x, p):
    B, N, C = x.shape
    nh = p["num_heads"]
    assert C % nh == 0
    hd = C // nh
    cp = _round_up(C, 128)                 # lane-dense per-section width for attention
    scale = p["scale"]

    # Weight prep: pad q/k/v sections to cp columns each and fold the attention scale
    # into the q projection (removes the per-element q*scale multiply in the kernel).
    w_qkv = p["w_qkv"].astype(jnp.float32)
    b_qkv = p["b_qkv"].astype(jnp.float32)
    wq, wk, wv = w_qkv[:, :C], w_qkv[:, C:2 * C], w_qkv[:, 2 * C:]
    bq, bk, bv = b_qkv[:C], b_qkv[C:2 * C], b_qkv[2 * C:]
    w_qkv_p = jnp.concatenate(
        [_pad2d(wq * scale, C, cp), _pad2d(wk, C, cp), _pad2d(wv, C, cp)],
        axis=1).astype(jnp.bfloat16)                                   # (C, 3*cp)
    b_qkv_p = jnp.concatenate(
        [jnp.pad(bq * scale, (0, cp - C)), jnp.pad(bk, (0, cp - C)),
         jnp.pad(bv, (0, cp - C))])                                    # (3*cp,)
    w_proj_p = _pad2d(p["w_proj"], cp, C)        # zero rows for padded attention columns

    x2d = x.reshape(B * N, C)

    # x = x + proj(Attention(LN1(x)))  -- LN fused into QKV matmul, residual fused
    # into the proj matmul epilogue, no HBM transposes around attention.
    qkv = ln_linear_pallas(x2d, p["ln1_g"], p["ln1_b"], w_qkv_p, b_qkv_p)   # (M,3cp) bf16
    attn = attention_pallas(qkv.reshape(B, N, 3 * cp),
                            num_heads=nh, head_dim=hd, c_pad=cp)            # (B,N,cp) bf16
    x1 = linear_residual_pallas(attn.reshape(B * N, cp), w_proj_p,
                                p["b_proj"], x2d)                           # (M,C) f32

    # x = x + Mlp(LN2(x))  -- LN + fc1 + swish + fc2 + residual in one kernel.
    out2d = ln_mlp_residual_pallas(x1, p["ln2_g"], p["ln2_b"],
                                   p["w1"], p["b1"], p["w2"], p["b2"])
    return out2d.reshape(B, N, C)


# --------------------------------------------------------------------------------------
# Params + precision-matched pure-JAX reference
# --------------------------------------------------------------------------------------
def init_block_params(key, dim, num_heads, mlp_ratio=2.0):
    hidden = int(dim * mlp_ratio)
    ks = jax.random.split(key, 8)

    def linear_init(kw, kb, fan_in, fan_out):
        lim = 1.0 / math.sqrt(fan_in)
        w = jax.random.uniform(kw, (fan_in, fan_out), minval=-lim, maxval=lim,
                               dtype=jnp.float32).astype(jnp.bfloat16)
        b = jax.random.uniform(kb, (fan_out,), minval=-lim, maxval=lim,
                               dtype=jnp.float32)
        return w, b

    w_qkv, b_qkv = linear_init(ks[0], ks[1], dim, dim * 3)
    w_proj, b_proj = linear_init(ks[2], ks[3], dim, dim)
    w1, b1 = linear_init(ks[4], ks[5], dim, hidden)
    w2, b2 = linear_init(ks[6], ks[7], hidden, dim)
    head_dim = dim // num_heads
    return dict(
        num_heads=num_heads, scale=head_dim ** -0.5,
        ln1_g=jnp.ones((dim,), jnp.float32), ln1_b=jnp.zeros((dim,), jnp.float32),
        ln2_g=jnp.ones((dim,), jnp.float32), ln2_b=jnp.zeros((dim,), jnp.float32),
        w_qkv=w_qkv, b_qkv=b_qkv, w_proj=w_proj, b_proj=b_proj,
        w1=w1, b1=b1, w2=w2, b2=b2)


def block_reference(x, p):
    """Pure-JAX reference using the same bf16-matmul / f32-accumulate precision."""
    def ln(y, g, b):
        mu = jnp.mean(y, axis=-1, keepdims=True)
        yc = y - mu
        var = jnp.mean(yc * yc, axis=-1, keepdims=True)
        return yc * jax.lax.rsqrt(var + 1e-6) * g + b

    def lin(y, w, b):
        return jnp.dot(y.astype(jnp.bfloat16), w,
                       preferred_element_type=jnp.float32) + b

    B, N, C = x.shape
    nh = p["num_heads"]
    hd = C // nh

    h = ln(x, p["ln1_g"], p["ln1_b"])
    qkv = lin(h.reshape(B * N, C), p["w_qkv"], p["b_qkv"])
    qkv = qkv.reshape(B, N, 3, nh, hd).transpose(2, 0, 3, 1, 4)
    q, k, v = qkv[0], qkv[1], qkv[2]
    s = jnp.einsum("bhnd,bhmd->bhnm",
                   (q * p["scale"]).astype(jnp.bfloat16), k.astype(jnp.bfloat16),
                   preferred_element_type=jnp.float32)
    att = jax.nn.softmax(s, axis=-1)
    o = jnp.einsum("bhnm,bhmd->bhnd", att.astype(jnp.bfloat16),
                   v.astype(jnp.bfloat16), preferred_element_type=jnp.float32)
    o = o.transpose(0, 2, 1, 3).reshape(B * N, C)
    x = x + lin(o, p["w_proj"], p["b_proj"]).reshape(B, N, C)

    h2 = ln(x, p["ln2_g"], p["ln2_b"])
    hm = lin(h2.reshape(B * N, C), p["w1"], p["b1"])
    hm = hm * jax.nn.sigmoid(hm)
    x = x + lin(hm, p["w2"], p["b2"]).reshape(B, N, C)
    return x


if __name__ == "__main__":
    B, N, dim, num_heads = 2, 8, 128, 4

    key = jax.random.PRNGKey(0)
    kx, kp = jax.random.split(key)
    x = jax.random.normal(kx, (B, N, dim), dtype=jnp.float32)
    params = init_block_params(kp, dim, num_heads, mlp_ratio=2.0)

    y = block_forward(x, params)
    y = jax.block_until_ready(y)

    y_ref = block_reference(x, params)
    assert y.shape == (B, N, dim)
    max_diff = float(jnp.max(jnp.abs(y - y_ref)))
    # bf16 activations at HBM boundaries + scale folded into Wq + EUP approx reciprocal
    # introduce small extra rounding vs the reference -> 3e-2 tolerance.
    assert jnp.allclose(y, y_ref, atol=3e-2, rtol=3e-2), (
        f"mismatch vs reference, max abs diff {max_diff}")
    print("KERNEL_OK")
</pallas_src>

<mosaic_0001>
module attributes {stable_mosaic.version = 11 : i64} {
  func.func @_ln_linear_kernel(%arg0: i32, %arg1: i32, %arg2: memref<16x128xf32, #tpu.memory_space<vmem>>, %arg3: memref<1x128xf32, #tpu.memory_space<vmem>>, %arg4: memref<1x128xf32, #tpu.memory_space<vmem>>, %arg5: memref<128x384xbf16, #tpu.memory_space<vmem>>, %arg6: memref<1x384xf32, #tpu.memory_space<vmem>>, %arg7: memref<16x384xbf16, #tpu.memory_space<vmem>>) attributes {dimension_semantics = [#tpu.dimension_semantics<parallel>, #tpu.dimension_semantics<parallel>], iteration_bounds = array<i64: 1, 1>, scalar_prefetch = 0 : i64, scratch_operands = 0 : i64, tpu.core_type = #tpu.core_type<tc>, window_params = [{transform_indices = @transform_0, window_bounds = array<i64: 16, 128>}, {pipeline_mode = #tpu.pipeline_mode<synchronous>, transform_indices = @transform_1, window_bounds = array<i64: 1, 128>}, {pipeline_mode = #tpu.pipeline_mode<synchronous>, transform_indices = @transform_2, window_bounds = array<i64: 1, 128>}, {transform_indices = @transform_3, window_bounds = array<i64: 128, 384>}, {transform_indices = @transform_4, window_bounds = array<i64: 1, 384>}, {transform_indices = @transform_5, window_bounds = array<i64: 16, 384>}]} {
    %c0 = arith.constant 0 : index
    %c0_0 = arith.constant 0 : index
    %0 = vector.load %arg2[%c0, %c0_0] : memref<16x128xf32, #tpu.memory_space<vmem>>, vector<16x128xf32>
    %cst = arith.constant dense<0.000000e+00> : vector<16xf32>
    %1 = vector.multi_reduction <add>, %0, %cst [1] : vector<16x128xf32> to vector<16xf32>
    %2 = vector.shape_cast %1 : vector<16xf32> to vector<16x1xf32>
    %cst_1 = arith.constant 1.280000e+02 : f32
    %3 = vector.broadcast %cst_1 : f32 to vector<16x1xf32>
    %4 = arith.divf %2, %3 : vector<16x1xf32>
    %5 = vector.broadcast %4 : vector<16x1xf32> to vector<16x128xf32>
    %6 = arith.subf %0, %5 : vector<16x128xf32>
    %7 = arith.mulf %6, %6 : vector<16x128xf32>
    %cst_2 = arith.constant dense<0.000000e+00> : vector<16xf32>
    %8 = vector.multi_reduction <add>, %7, %cst_2 [1] : vector<16x128xf32> to vector<16xf32>
    %9 = vector.shape_cast %8 : vector<16xf32> to vector<16x1xf32>
    %cst_3 = arith.constant 1.280000e+02 : f32
    %10 = vector.broadcast %cst_3 : f32 to vector<16x1xf32>
    %11 = arith.divf %9, %10 : vector<16x1xf32>
    %cst_4 = arith.constant 9.99999997E-7 : f32
    %12 = vector.broadcast %cst_4 : f32 to vector<16x1xf32>
    %13 = arith.addf %11, %12 : vector<16x1xf32>
    %14 = math.rsqrt %13 : vector<16x1xf32>
    %15 = vector.broadcast %14 : vector<16x1xf32> to vector<16x128xf32>
    %16 = arith.mulf %6, %15 : vector<16x128xf32>
    %c0_5 = arith.constant 0 : index
    %c0_6 = arith.constant 0 : index
    %17 = vector.load %arg3[%c0_5, %c0_6] : memref<1x128xf32, #tpu.memory_space<vmem>>, vector<1x128xf32>
    %18 = vector.broadcast %17 : vector<1x128xf32> to vector<16x128xf32>
    %19 = arith.mulf %16, %18 : vector<16x128xf32>
    %c0_7 = arith.constant 0 : index
    %c0_8 = arith.constant 0 : index
    %20 = vector.load %arg4[%c0_7, %c0_8] : memref<1x128xf32, #tpu.memory_space<vmem>>, vector<1x128xf32>
    %21 = vector.broadcast %20 : vector<1x128xf32> to vector<16x128xf32>
    %22 = arith.addf %19, %21 : vector<16x128xf32>
    %23 = arith.truncf %22 : vector<16x128xf32> to vector<16x128xbf16>
    %c0_9 = arith.constant 0 : index
    %c0_10 = arith.constant 0 : index
    %24 = vector.load %arg5[%c0_9, %c0_10] : memref<128x384xbf16, #tpu.memory_space<vmem>>, vector<128x384xbf16>
    %cst_11 = arith.constant dense<0.000000e+00> : vector<16x384xf32>
    %25 = tpu.matmul %23, %24, %cst_11 {dimension_numbers = #tpu.dot_dimension_numbers<[1], [0], [0], [1], [0, 0, 1, 1], [], []>} : vector<16x128xbf16>, vector<128x384xbf16>, vector<16x384xf32> -> vector<16x384xf32>
    %c0_12 = arith.constant 0 : index
    %c0_13 = arith.constant 0 : index
    %26 = vector.load %arg6[%c0_12, %c0_13] : memref<1x384xf32, #tpu.memory_space<vmem>>, vector<1x384xf32>
    %27 = vector.broadcast %26 : vector<1x384xf32> to vector<16x384xf32>
    %28 = arith.addf %25, %27 : vector<16x384xf32>
    %29 = arith.truncf %28 : vector<16x384xf32> to vector<16x384xbf16>
    %c0_14 = arith.constant 0 : index
    %c0_15 = arith.constant 0 : index
    %30 = vector.load %arg7[%c0_14, %c0_15] : memref<16x384xbf16, #tpu.memory_space<vmem>>, vector<16x384xbf16>
    tpu.vector_store %arg7[%c0_14, %c0_15], %29 {strides = array<i32>} : memref<16x384xbf16, #tpu.memory_space<vmem>>, vector<16x384xbf16>,
    return
  }
  func.func @transform_0(%arg0: i32, %arg1: i32) -> (i32, i32) {
    %c0_i32 = arith.constant 0 : i32
    %c0_i32_0 = arith.constant 0 : i32
    return %arg0, %c0_i32 : i32, i32
  }
  func.func @transform_1(%arg0: i32, %arg1: i32) -> (i32, i32) {
    %c0_i32 = arith.constant 0 : i32
    %c0_i32_0 = arith.constant 0 : i32
    %c0_i32_1 = arith.constant 0 : i32
    return %c0_i32, %c0_i32_0 : i32, i32
  }
  func.func @transform_2(%arg0: i32, %arg1: i32) -> (i32, i32) {
    %c0_i32 = arith.constant 0 : i32
    %c0_i32_0 = arith.constant 0 : i32
    %c0_i32_1 = arith.constant 0 : i32
    return %c0_i32, %c0_i32_0 : i32, i32
  }
  func.func @transform_3(%arg0: i32, %arg1: i32) -> (i32, i32) {
    %c0_i32 = arith.constant 0 : i32
    %c0_i32_0 = arith.constant 0 : i32
    return %c0_i32, %arg1 : i32, i32
  }
  func.func @transform_4(%arg0: i32, %arg1: i32) -> (i32, i32) {
    %c0_i32 = arith.constant 0 : i32
    %c0_i32_0 = arith.constant 0 : i32
    return %c0_i32, %arg1 : i32, i32
  }
  func.func @transform_5(%arg0: i32, %arg1: i32) -> (i32, i32) {
    %c0_i32 = arith.constant 0 : i32
    return %arg0, %arg1 : i32, i32
  }
}

</mosaic_0001>

<llo_original>
// kernel: tpu_custom_call.1
$region0: #{tpu_custom_call.1}
  #allocation0 [shape = 'u32[]', space=smem, size = 0x4, offset = 0x4, fixed_abs, tag = 'smem constant byte address 0x4 - core index']
  #allocation1 [shape = 'u32[72,128]{1,0:T(1,128)}', space=vmem, size = 0x9000, scoped, tag = 'internal scratch']
  %s0 = inlined_call_operand.hbm [shape: f32[16,128], index: 0, kind: input, shape index: {}]
  %s1 = inlined_call_operand.hbm [shape: f32[1,128], index: 1, kind: input, shape index: {}]
  %s2 = inlined_call_operand.hbm [shape: f32[1,128], index: 2, kind: input, shape index: {}]
  %s3 = inlined_call_operand.hbm [shape: bf16[128,384], index: 3, kind: input, shape index: {}]
  %s4 = inlined_call_operand.vmem [shape: f32[1,384], index: 4, kind: input, shape index: {}]
  %s5 = inlined_call_operand.hbm [shape: bf16[16,384], index: 5, kind: output, shape index: {}]
  %s6 = sld [smem:[#allocation0]]
  $region46: #{tpu_custom_call.1} parent=0
    _
  %s8 = ssub.s32 1, %s6
  %s9 = scalar_select 0, %s8, %s6
  $region1: #{tpu_custom_call.1} parent=0
    #allocation2 [shape = 'u8[8192]{0}', space=vmem, size = 0x2000, scoped, tag = 'input window, operand 0, single buffered']
    #allocation3 [shape = 's32[1]{0}', space=sflag, size = 0x4, scoped, tag = 'scoped memory for tpu_custom_call.1']
    #allocation4 [shape = 's32[1]{0}', space=sflag, size = 0x4, scoped, tag = 'scoped memory for tpu_custom_call.1']
    #allocation5 [shape = 'u8[512]{0}', space=vmem, size = 0x400, scoped, tag = 'input window, operand 1, single buffered']
    #allocation6 [shape = 's32[1]{0}', space=sflag, size = 0x4, scoped, tag = 'scoped memory for tpu_custom_call.1']
    #allocation7 [shape = 'u8[512]{0}', space=vmem, size = 0x400, scoped, tag = 'input window, operand 2, single buffered']
    #allocation8 [shape = 'u8[98304]{0}', space=vmem, size = 0x18000, scoped, tag = 'input window, operand 3, single buffered']
    #allocation9 [shape = 's32[1]{0}', space=sflag, size = 0x4, scoped, tag = 'scoped memory for tpu_custom_call.1']
    #allocation10 [shape = 'u8[12288]{0}', space=vmem, size = 0x3000, scoped, tag = 'output window, operand 0, single buffered']
    %10 = vsyncpa [#allocation3], 0
    %11 = vsyncpa [#allocation6], 0
    %12 = vsyncpa [#allocation9], 0
    %13 = vsyncpa [#allocation4], 0
    // Predicated region
    $region2: #{tpu_custom_call.1} parent=1 // pred_check
      _
    $region3: #{tpu_custom_call.1} parent=1 // pred_check_branch
      %15 = sbr.rel (0) target = $region5
    $region4: #{tpu_custom_call.1} parent=1 // pred_region
      %17 = vsyncadd [#allocation3], 0
      %s18 = sshll.u32 %s0, 4
      %s19 = int_to_ptr.hbm [resolvable:$true] %s18
      %s20 = sshll.u32 [#allocation2], 4
      %s21 = int_to_ptr.vmem [resolvable:$true] %s20
      %26 = dma.hbm_to_vmem [thread:$0]  %s19, 256, %s21, [#allocation3], 128, 128, 8
    $region5: #{tpu_custom_call.1} parent=1 // pred_fallthru
      _
    // Predicated region
    $region6: #{tpu_custom_call.1} parent=1 // pred_check
      _
    $region7: #{tpu_custom_call.1} parent=1 // pred_check_branch
      %28 = sbr.rel (0) target = $region9
    $region8: #{tpu_custom_call.1} parent=1 // pred_region
      %30 = vsyncadd [#allocation6], 0
      %s32 = sshll.u32 %s1, 4
      %s33 = int_to_ptr.hbm [resolvable:$true] %s32
      %s34 = sshll.u32 [#allocation5], 4
      %s35 = int_to_ptr.vmem [resolvable:$true] %s34
      %37 = dma.hbm_to_vmem [thread:$0]  %s33, 16, %s35, [#allocation6]
    $region9: #{tpu_custom_call.1} parent=1 // pred_fallthru
      _
    // Predicated region
    $region10: #{tpu_custom_call.1} parent=1 // pred_check
      _
    $region11: #{tpu_custom_call.1} parent=1 // pred_check_branch
      %39 = sbr.rel (0) target = $region13
    $region12: #{tpu_custom_call.1} parent=1 // pred_region
      %41 = vsyncadd [#allocation6], 0
      %s43 = sshll.u32 %s2, 4
      %s44 = int_to_ptr.hbm [resolvable:$true] %s43
      %s45 = sshll.u32 [#allocation7], 4
      %s46 = int_to_ptr.vmem [resolvable:$true] %s45
      %48 = dma.hbm_to_vmem [thread:$0]  %s44, 16, %s46, [#allocation6]
    $region13: #{tpu_custom_call.1} parent=1 // pred_fallthru
      _
    // Predicated region
    $region14: #{tpu_custom_call.1} parent=1 // pred_check
      _
    $region15: #{tpu_custom_call.1} parent=1 // pred_check_branch
      %50 = sbr.rel (0) target = $region17
    $region16: #{tpu_custom_call.1} parent=1 // pred_region
      %52 = vsyncadd [#allocation9], 0
      %s53 = sshll.u32 %s3, 4
      %s54 = int_to_ptr.hbm [resolvable:$true] %s53
      %s55 = sshll.u32 [#allocation8], 4
      %s56 = int_to_ptr.vmem [resolvable:$true] %s55
      %61 = dma.hbm_to_vmem [thread:$0]  %s54, 3072, %s56, [#allocation9], 192, 192, 12
    $region17: #{tpu_custom_call.1} parent=1 // pred_fallthru
      _
    // Predicated region
    $region18: #{tpu_custom_call.1} parent=1 // pred_check
      _
    $region19: #{tpu_custom_call.1} parent=1 // pred_check_branch
      %63 = sbr.rel (0) target = $region21
    $region20: #{tpu_custom_call.1} parent=1 // pred_region
      _
    $region21: #{tpu_custom_call.1} parent=1 // pred_fallthru
      _
    // Predicated region
    $region22: #{tpu_custom_call.1} parent=1 // pred_check
      _
    $region23: #{tpu_custom_call.1} parent=1 // pred_check_branch
      %65 = sbr.rel (0) target = $region25
    $region24: #{tpu_custom_call.1} parent=1 // pred_region
      %67 = dma.done [#allocation3], 256
    $region25: #{tpu_custom_call.1} parent=1 // pred_fallthru
      _
    // Predicated region
    $region26: #{tpu_custom_call.1} parent=1 // pred_check
      _
    $region27: #{tpu_custom_call.1} parent=1 // pred_check_branch
      %69 = sbr.rel (0) target = $region29
    $region28: #{tpu_custom_call.1} parent=1 // pred_region
      %71 = dma.done [#allocation6], 16
    $region29: #{tpu_custom_call.1} parent=1 // pred_fallthru
      _
    // Predicated region
    $region30: #{tpu_custom_call.1} parent=1 // pred_check
      _
    $region31: #{tpu_custom_call.1} parent=1 // pred_check_branch
      %73 = sbr.rel (0) target = $region33
    $region32: #{tpu_custom_call.1} parent=1 // pred_region
      %75 = dma.done [#allocation6], 16
    $region33: #{tpu_custom_call.1} parent=1 // pred_fallthru
      _
    // Predicated region
    $region34: #{tpu_custom_call.1} parent=1 // pred_check
      _
    $region35: #{tpu_custom_call.1} parent=1 // pred_check_branch
      %77 = sbr.rel (0) target = $region37
    $region36: #{tpu_custom_call.1} parent=1 // pred_region
      %79 = dma.done [#allocation9], 3072
    $region37: #{tpu_custom_call.1} parent=1 // pred_fallthru
      _
    %v80 = vld [vmem:[#allocation2] sm:$0xff]
    %v81 = vld [vmem:[#allocation2 + $0x8] sm:$0xff]
    %82 = vadd.xlane.f32.xlu0 %v80
    %v83 = vpop.xlane.xlu0 %82
    %84 = vadd.xlane.f32.xlu0 %v81
    %v85 = vpop.xlane.xlu0 %84
    %v86 = vrcp.pop 128.0
    %v87 = vmul.f32 128.0, %v86
    %v88 = vsub.f32 1.0, %v87
    %v89 = vmul.f32 %v86, %v88
    %v90 = vadd.f32 %v86, %v89
    %vm91 = vweird.f32 %v86
    %v92 = vsel %vm91, %v86, %v90
    %v93 = vmul.f32 %v83, %v92
    %v94 = vmul.f32 %v85, %v92
    %v95 = vsub.f32 %v80, %v93
    %v96 = vsub.f32 %v81, %v94
    %v97 = vmul.f32 %v95, %v95
    %v98 = vmul.f32 %v96, %v96
    %99 = vadd.xlane.f32.xlu0 %v97
    %v100 = vpop.xlane.xlu0 %99
    %101 = vadd.xlane.f32.xlu0 %v98
    %v102 = vpop.xlane.xlu0 %101
    %v103 = vmul.f32 %v100, %v92
    %v104 = vmul.f32 %v102, %v92
    %v105 = vadd.f32 %v103, 1e-06
    %v106 = vadd.f32 %v104, 1e-06
    %v107 = vrsqrt.pop %v105
    %v108 = vmul.f32 %v107, %v105
    %v109 = vmul.f32 %v108, %v107
    %v110 = vmul.f32 0.5, %v109
    %v111 = vsub.f32 1.5, %v110
    %v112 = vmul.f32 %v107, %v111
    %vm113 = vweird.f32 %v105
    %vm114 = vweird.f32 %v107
    %vm115 = vmor %vm113, %vm114
    %v116 = vsel %vm115, %v107, %v112
    %v117 = vrsqrt.pop %v106
    %v118 = vmul.f32 %v117, %v106
    %v119 = vmul.f32 %v118, %v117
    %v120 = vmul.f32 0.5, %v119
    %v121 = vsub.f32 1.5, %v120
    %v122 = vmul.f32 %v117, %v121
    %vm123 = vweird.f32 %v106
    %vm124 = vweird.f32 %v117
    %vm125 = vmor %vm123, %vm124
    %v126 = vsel %vm125, %v117, %v122
    %v127 = vmul.f32 %v95, %v116
    %v128 = vmul.f32 %v96, %v126
    %v129 = vld [vmem:[#allocation5] sm:$0x1]
    %v131 = vperm.slane %v129, 0
    %v133 = vmul.f32 %v127, %v131
    %v134 = vmul.f32 %v128, %v131
    %v135 = vld [vmem:[#allocation7] sm:$0x1]
    %v137 = vperm.slane %v135, 0
    %v139 = vadd.f32 %v133, %v137
    %v140 = vadd.f32 %v134, %v137
    %v141 = vpack.c.bf16 %v140, %v139
    %v142 = vld [vmem:[#allocation8] sm:$0xff]
    %v143 = vld [vmem:[#allocation8 + $0x8] sm:$0xf]
    %v144 = vld [vmem:[#allocation8 + $0xc] sm:$0xff]
    %v145 = vld [vmem:[#allocation8 + $0x14] sm:$0xf]
    %v146 = vld [vmem:[#allocation8 + $0x18] sm:$0xff]
    %v147 = vld [vmem:[#allocation8 + $0x20] sm:$0xf]
    %v148 = vld [vmem:[#allocation8 + $0x24] sm:$0xff]
    %v149 = vld [vmem:[#allocation8 + $0x2c] sm:$0xf]
    %v150 = vld [vmem:[#allocation8 + $0x30] sm:$0xff]
    %v151 = vld [vmem:[#allocation8 + $0x38] sm:$0xf]
    %v152 = vld [vmem:[#allocation8 + $0x3c] sm:$0xff]
    %v153 = vld [vmem:[#allocation8 + $0x44] sm:$0xf]
    %v154 = vld [vmem:[#allocation8 + $0x48] sm:$0xff]
    %v155 = vld [vmem:[#allocation8 + $0x50] sm:$0xf]
    %v156 = vld [vmem:[#allocation8 + $0x54] sm:$0xff]
    %v157 = vld [vmem:[#allocation8 + $0x5c] sm:$0xf]
    %v158 = vld [vmem:[#allocation8 + $0x60] sm:$0xff]
    %v159 = vld [vmem:[#allocation8 + $0x68] sm:$0xf]
    %v160 = vld [vmem:[#allocation8 + $0x6c] sm:$0xff]
    %v161 = vld [vmem:[#allocation8 + $0x74] sm:$0xf]
    %v162 = vld [vmem:[#allocation8 + $0x78] sm:$0xff]
    %v163 = vld [vmem:[#allocation8 + $0x80] sm:$0xf]
    %v164 = vld [vmem:[#allocation8 + $0x84] sm:$0xff]
    %v165 = vld [vmem:[#allocation8 + $0x8c] sm:$0xf]
    %v166 = vld [vmem:[#allocation8 + $0x90] sm:$0xff]
    %v167 = vld [vmem:[#allocation8 + $0x98] sm:$0xf]
    %v168 = vld [vmem:[#allocation8 + $0x9c] sm:$0xff]
    %v169 = vld [vmem:[#allocation8 + $0xa4] sm:$0xf]
    %v170 = vld [vmem:[#allocation8 + $0xa8] sm:$0xff]
    %v171 = vld [vmem:[#allocation8 + $0xb0] sm:$0xf]
    %v172 = vld [vmem:[#allocation8 + $0xb4] sm:$0xff]
    %v173 = vld [vmem:[#allocation8 + $0xbc] sm:$0xf]
    %v174 = vld [vmem:[%s4] sm:$0x7]
    %v176 = vperm.slane %v174, 0
    %v177 = vperm.slane %v174, 1
    %v178 = vperm.slane %v174, 2
    %v214 = vunpack.c.l.b16 %v142
    %v215 = vunpack.c.h.b16 %v142
    %v216 = vunpack.c.l.b16 %v143
    %v217 = vunpack.c.l.b16 %v144
    %v218 = vunpack.c.h.b16 %v144
    %v219 = vunpack.c.l.b16 %v145
    %v220 = vunpack.c.l.b16 %v146
    %v221 = vunpack.c.h.b16 %v146
    %v222 = vunpack.c.l.b16 %v147
    %v223 = vunpack.c.l.b16 %v148
    %v224 = vunpack.c.h.b16 %v148
    %v225 = vunpack.c.l.b16 %v149
    %v226 = vunpack.c.l.b16 %v150
    %v227 = vunpack.c.h.b16 %v150
    %v228 = vunpack.c.l.b16 %v151
    %v229 = vunpack.c.l.b16 %v152
    %v230 = vunpack.c.h.b16 %v152
    %v231 = vunpack.c.l.b16 %v153
    %v232 = vunpack.c.l.b16 %v154
    %v233 = vunpack.c.h.b16 %v154
    %v234 = vunpack.c.l.b16 %v155
    %v235 = vunpack.c.l.b16 %v156
    %v236 = vunpack.c.h.b16 %v156
    %v237 = vunpack.c.l.b16 %v157
    %v238 = vunpack.c.l.b16 %v158
    %v239 = vunpack.c.h.b16 %v158
    %v240 = vunpack.c.l.b16 %v159
    %v241 = vunpack.c.l.b16 %v160
    %v242 = vunpack.c.h.b16 %v160
    %v243 = vunpack.c.l.b16 %v161
    %v244 = vunpack.c.l.b16 %v162
    %v245 = vunpack.c.h.b16 %v162
    %v246 = vunpack.c.l.b16 %v163
    %v247 = vunpack.c.l.b16 %v164
    %v248 = vunpack.c.h.b16 %v164
    %v249 = vunpack.c.l.b16 %v165
    %v250 = vunpack.c.l.b16 %v166
    %v251 = vunpack.c.h.b16 %v166
    %v252 = vunpack.c.l.b16 %v167
    %v253 = vunpack.c.l.b16 %v168
    %v254 = vunpack.c.h.b16 %v168
    %v255 = vunpack.c.l.b16 %v169
    %v256 = vunpack.c.l.b16 %v170
    %v257 = vunpack.c.h.b16 %v170
    %v258 = vunpack.c.l.b16 %v171
    %v259 = vunpack.c.l.b16 %v172
    %v260 = vunpack.c.h.b16 %v172
    %v261 = vunpack.c.l.b16 %v173
    %v262 = vpack.c.b16 %v217, %v214
    %v263 = vpack.c.b16 %v218, %v215
    %v264 = vpack.c.b16 %v219, %v216
    %v265 = vpack.c.b16 %v223, %v220
    %v266 = vpack.c.b16 %v224, %v221
    %v267 = vpack.c.b16 %v225, %v222
    %v268 = vpack.c.b16 %v229, %v226
    %v269 = vpack.c.b16 %v230, %v227
    %v270 = vpack.c.b16 %v231, %v228
    %v271 = vpack.c.b16 %v235, %v232
    %v272 = vpack.c.b16 %v236, %v233
    %v273 = vpack.c.b16 %v237, %v234
    %v274 = vpack.c.b16 %v241, %v238
    %v275 = vpack.c.b16 %v242, %v239
    %v276 = vpack.c.b16 %v243, %v240
    %v277 = vpack.c.b16 %v247, %v244
    %v278 = vpack.c.b16 %v248, %v245
    %v279 = vpack.c.b16 %v249, %v246
    %v280 = vpack.c.b16 %v253, %v250
    %v281 = vpack.c.b16 %v254, %v251
    %v282 = vpack.c.b16 %v255, %v252
    %v283 = vpack.c.b16 %v259, %v256
    %v284 = vpack.c.b16 %v260, %v257
    %v285 = vpack.c.b16 %v261, %v258
    %310 = vmatpush.bf16.msra.mxu0 %v283
    %311 = vmatpush.bf16.msra.mxu0 %v280
    %312 = vmatpush.bf16.msra.mxu0 %v277
    %313 = vmatpush.bf16.msra.mxu0 %v274
    %314 = vmatpush.bf16.msra.mxu0 %v271
    %315 = vmatpush.bf16.msra.mxu0 %v268
    %316 = vmatpush.bf16.msra.mxu0 %v265
    %317 = vmatpush.bf16.msra.mxu0 %v262
    %318 = vmatmul.bf16.gmra.mxu0 %v141
    %v319 = vpop.f32.mrf.mxu0
    %v320 = vadd.f32 %v176, %v319
    %v321 = vpop.f32.mrf.mxu0
    %v322 = vadd.f32 %v176, %v321
    %323 = vdwg.mxu0
    %324 = vmatpush.bf16.msra.mxu0 %v284
    %325 = vmatpush.bf16.msra.mxu0 %v281
    %326 = vmatpush.bf16.msra.mxu0 %v278
    %327 = vmatpush.bf16.msra.mxu0 %v275
    %328 = vmatpush.bf16.msra.mxu0 %v272
    %329 = vmatpush.bf16.msra.mxu0 %v269
    %330 = vmatpush.bf16.msra.mxu0 %v266
    %331 = vmatpush.bf16.msra.mxu0 %v263
    %332 = vmatmul.bf16.gmra.mxu0 %v141
    %v333 = vpop.f32.mrf.mxu0
    %v334 = vadd.f32 %v177, %v333
    %v335 = vpop.f32.mrf.mxu0
    %v336 = vadd.f32 %v177, %v335
    %337 = vdwg.mxu0
    %338 = vmatpush.bf16.msra.mxu0 %v285
    %339 = vmatpush.bf16.msra.mxu0 %v282
    %340 = vmatpush.bf16.msra.mxu0 %v279
    %341 = vmatpush.bf16.msra.mxu0 %v276
    %342 = vmatpush.bf16.msra.mxu0 %v273
    %343 = vmatpush.bf16.msra.mxu0 %v270
    %344 = vmatpush.bf16.msra.mxu0 %v267
    %345 = vmatpush.bf16.msra.mxu0 %v264
    %346 = vmatmul.bf16.gmra.mxu0 %v141
    %v347 = vpop.f32.mrf.mxu0
    %v348 = vadd.f32 %v178, %v347
    %v349 = vpop.f32.mrf.mxu0
    %v350 = vadd.f32 %v178, %v349
    %351 = vdwg.mxu0
    %v352 = vpack.c.bf16 %v334, %v320
    %v353 = vpack.c.bf16 %v348, %v348
    %v354 = vpack.c.bf16 %v336, %v322
    %v355 = vpack.c.bf16 %v350, %v350
    %356 = vst [vmem:[#allocation10] sm:$0xff] %v352
    %357 = vst [vmem:[#allocation10 + $0x8] sm:$0xf] %v353
    %358 = vst [vmem:[#allocation10 + $0xc] sm:$0xff] %v354
    %359 = vst [vmem:[#allocation10 + $0x14] sm:$0xf] %v355
    // Predicated region
    $region38: #{tpu_custom_call.1} parent=1 // pred_check
      _
    $region39: #{tpu_custom_call.1} parent=1 // pred_check_branch
      %361 = sbr.rel (0) target = $region41
    $region40: #{tpu_custom_call.1} parent=1 // pred_region
      %363 = vsyncadd [#allocation4], 0
      %s364 = sshll.u32 [#allocation10], 4
      %s365 = int_to_ptr.vmem [resolvable:$true] %s364
      %s366 = sshll.u32 %s5, 4
      %s367 = int_to_ptr.hbm [resolvable:$true] %s366
      %372 = dma.vmem_to_hbm [thread:$0]  %s365, 384, %s367, [#allocation4], 192, 192, 12
    $region41: #{tpu_custom_call.1} parent=1 // pred_fallthru
      _
    // Predicated region
    $region42: #{tpu_custom_call.1} parent=1 // pred_check
      _
    $region43: #{tpu_custom_call.1} parent=1 // pred_check_branch
      %374 = sbr.rel (0) target = $region45
    $region44: #{tpu_custom_call.1} parent=1 // pred_region
      %376 = dma.done [#allocation4], 384
    $region45: #{tpu_custom_call.1} parent=1 // pred_fallthru
      _
    %377 = vsyncpa [#allocation3], 1
    %378 = vsyncpa [#allocation6], 1
    %379 = vsyncpa [#allocation9], 1
    %380 = vsyncpa [#allocation4], 1

</llo_original>
